<compile_context>
chip_gen: v7x
topology: tpu7x:2x2x1
jax: 0.10.0
libtpu: 0.0.40
codegen_flags: <defaults>
</compile_context>

<pallas_src>
import functools

import jax
import jax.numpy as jnp
from jax import lax
from jax.experimental import pallas as pl
from jax.experimental.pallas import tpu as pltpu

LANE = 128
MAX_BLOCK_ROWS = 512  # 512 x 1024 f32 = 2 MiB/buffer; 2 arrays x 2 bufs = 8 MiB VMEM


def _sublane_multiple(dtype) -> int:
    # Minimum sublane tile per dtype width (f32: 8, bf16: 16, int8/fp8: 32).
    return {4: 8, 2: 16, 1: 32}.get(jnp.dtype(dtype).itemsize, 8)


def _dropout_kernel(seed_ref, x_ref, o_ref, *, keep_threshold, scale,
                    block_rows, width):
    pid = pl.program_id(0)
    shape = x_ref.shape  # (block_rows, width)

    # Global flat element index (row-major over the slab).  int32 wraparound is
    # fine — it only feeds the hash.
    row = lax.broadcasted_iota(jnp.int32, shape, 0)
    col = lax.broadcasted_iota(jnp.int32, shape, 1)
    idx = (pid * block_rows + row) * width + col

    # Mix the seed in (golden-ratio offset => adjacent seeds shift the index
    # space by ~2.6e9, no stream overlap), then lowbias32 hash.  Signed int32
    # mul/xor/logical-shift give identical bit patterns to the unsigned hash
    # and lower cleanly on both Mosaic and the interpreter.
    h = idx + seed_ref[0] * jnp.int32(-1640531527)        # 0x9E3779B9
    h = h ^ lax.shift_right_logical(h, jnp.int32(16))
    h = h * jnp.int32(0x7FEB352D)
    h = h ^ lax.shift_right_logical(h, jnp.int32(15))
    h = h * jnp.int32(-2073274741)                        # 0x846CA68B
    h = h ^ lax.shift_right_logical(h, jnp.int32(16))

    # Top 31 bits -> uniform non-negative int32; keep iff below (1-p) * 2^31.
    r = lax.shift_right_logical(h, jnp.int32(1))
    keep = r < jnp.int32(keep_threshold)

    x = x_ref[...].astype(jnp.float32)
    o_ref[...] = jnp.where(keep, x * jnp.float32(scale), 0.0).astype(o_ref.dtype)


def dropout_mc(x, p, seed, *, active=True):
    """Pallas MC-dropout. x: any shape (e.g. NCHW). Returns same shape/dtype."""
    if not active or p == 0.0:
        return x
    if p >= 1.0:
        return jnp.zeros_like(x)

    orig_shape = x.shape
    dtype = x.dtype
    n = x.size
    itemsize = jnp.dtype(dtype).itemsize
    sub = _sublane_multiple(dtype)

    # Lane-dense slab: wide last dim for unmasked stores on big tensors,
    # 128 lanes for small ones so padding stays negligible.
    if n >= (1 << 20):
        width = 1024
    elif n >= (1 << 16):
        width = 512
    else:
        width = LANE

    rows = pl.cdiv(n, width)
    block_rows = min(MAX_BLOCK_ROWS, pl.cdiv(rows, sub) * sub)
    rows_padded = pl.cdiv(rows, block_rows) * block_rows
    n_padded = rows_padded * width

    x_flat = x.reshape(-1)
    if n_padded != n:
        # TODO(synk): a masked-store tail tile would avoid this extra HBM
        # round-trip for awkward sizes; aligned sizes skip it entirely.
        x_flat = jnp.pad(x_flat, (0, n_padded - n))
    x2d = x_flat.reshape(rows_padded, width)

    keep_threshold = min(int(round((1.0 - float(p)) * (1 << 31))), (1 << 31) - 1)
    scale = 1.0 / (1.0 - float(p))
    seed_arr = jnp.asarray([seed], dtype=jnp.int32)
    num_tiles = rows_padded // block_rows

    kernel = functools.partial(
        _dropout_kernel,
        keep_threshold=keep_threshold,
        scale=scale,
        block_rows=block_rows,
        width=width,
    )

    out2d = pl.pallas_call(
        kernel,
        out_shape=jax.ShapeDtypeStruct((rows_padded, width), dtype),
        grid_spec=pltpu.PrefetchScalarGridSpec(
            num_scalar_prefetch=1,
            grid=(num_tiles,),
            in_specs=[pl.BlockSpec((block_rows, width), lambda i, seed: (i, 0))],
            out_specs=pl.BlockSpec((block_rows, width), lambda i, seed: (i, 0)),
        ),
        compiler_params=pltpu.CompilerParams(
            # Tiles are independent (hash of global index), so the grid can be
            # sharded across both TensorCores on v7x; neutral on v5e/v6e.
            dimension_semantics=("parallel",),
        ),
        cost_estimate=pl.CostEstimate(
            flops=2 * n_padded,
            transcendentals=0,
            bytes_accessed=2 * n_padded * itemsize,
        ),
    )(seed_arr, x2d)

    out_flat = out2d.reshape(-1)
    if n_padded != n:
        out_flat = out_flat[:n]
    return out_flat.reshape(orig_shape)


class DropoutMCPallas:
    """Mirror of the PyTorch DropoutMC module (training defaults to True)."""

    def __init__(self, p: float, activate: bool = False):
        self.activate = activate
        self.p = p
        self.p_init = p
        self.training = True  # nn.Module default

    def __call__(self, x, seed=0):
        active = self.training or self.activate
        return dropout_mc(x, self.p, seed, active=active)


if __name__ == "__main__":
    key = jax.random.PRNGKey(0)
    # NCHW input, as the PyTorch module would receive from a conv stack.
    x = jax.random.normal(key, (2, 4, 16, 16), dtype=jnp.float32)

    p = 0.5
    module = DropoutMCPallas(p=p, activate=True)

    y = jax.block_until_ready(module(x, seed=1234))
    assert y.shape == x.shape and y.dtype == x.dtype

    mask = (y != 0)
    # Kept elements must equal x / (1 - p).
    kept_ok = jnp.allclose(jnp.where(mask, y, 0.0),
                           jnp.where(mask, x / (1.0 - p), 0.0),
                           rtol=1e-5, atol=1e-5)
    keep_frac = float(jnp.mean(mask.astype(jnp.float32)))
    assert bool(kept_ok), "kept elements not scaled by 1/(1-p)"
    assert 0.35 < keep_frac < 0.65, f"keep fraction {keep_frac} far from 1-p"

    # Different seeds must give different masks (independent MC samples).
    y2 = jax.block_until_ready(module(x, seed=1235))
    assert bool(jnp.any((y2 != 0) != mask)), "seeds produced identical masks"

    # Non-aligned size exercises the padded-tail path.
    x_odd = jax.random.normal(jax.random.PRNGKey(1), (3, 5, 7, 11),
                              dtype=jnp.float32)
    y_odd = jax.block_until_ready(module(x_odd, seed=7))
    m_odd = (y_odd != 0)
    assert bool(jnp.allclose(jnp.where(m_odd, y_odd, 0.0),
                             jnp.where(m_odd, x_odd / (1.0 - p), 0.0),
                             rtol=1e-5, atol=1e-5))

    # Inactive path (eval mode, activate=False) must be identity.
    module_eval = DropoutMCPallas(p=p, activate=False)
    module_eval.training = False
    y_eval = jax.block_until_ready(module_eval(x, seed=1234))
    assert bool(jnp.array_equal(y_eval, x))

    print("KERNEL_OK")
</pallas_src>

<mosaic_0001>
module attributes {stable_mosaic.version = 11 : i64} {
  func.func @_dropout_kernel(%arg0: i32, %arg1: memref<1xi32, #tpu.memory_space<smem>>, %arg2: memref<16x128xf32, #tpu.memory_space<vmem>>, %arg3: memref<16x128xf32, #tpu.memory_space<vmem>>) attributes {dimension_semantics = [#tpu.dimension_semantics<parallel>], iteration_bounds = array<i64: 1>, scalar_prefetch = 1 : i64, scratch_operands = 0 : i64, tpu.core_type = #tpu.core_type<tc>, window_params = [{transform_indices = @transform_0, window_bounds = array<i64: 16, 128>}, {transform_indices = @transform_1, window_bounds = array<i64: 16, 128>}]} {
    %0 = tpu.iota {dimensions = array<i32: 0>} : vector<16x128xi32>
    %1 = tpu.iota {dimensions = array<i32: 1>} : vector<16x128xi32>
    %c16_i32 = arith.constant 16 : i32
    %2 = arith.muli %arg0, %c16_i32 : i32
    %3 = vector.broadcast %2 : i32 to vector<16x128xi32>
    %4 = arith.addi %3, %0 : vector<16x128xi32>
    %c128_i32 = arith.constant 128 : i32
    %5 = vector.broadcast %c128_i32 : i32 to vector<16x128xi32>
    %6 = arith.muli %4, %5 : vector<16x128xi32>
    %7 = arith.addi %6, %1 : vector<16x128xi32>
    %c0 = arith.constant 0 : index
    %8 = memref.load %arg1[%c0] : memref<1xi32, #tpu.memory_space<smem>>
    %c-1640531527_i32 = arith.constant -1640531527 : i32
    %9 = arith.muli %8, %c-1640531527_i32 : i32
    %10 = vector.broadcast %9 : i32 to vector<16x128xi32>
    %11 = arith.addi %7, %10 : vector<16x128xi32>
    %c16_i32_0 = arith.constant 16 : i32
    %12 = vector.broadcast %c16_i32_0 : i32 to vector<16x128xi32>
    %13 = arith.shrui %11, %12 : vector<16x128xi32>
    %14 = arith.xori %11, %13 : vector<16x128xi32>
    %c2146121005_i32 = arith.constant 2146121005 : i32
    %15 = vector.broadcast %c2146121005_i32 : i32 to vector<16x128xi32>
    %16 = arith.muli %14, %15 : vector<16x128xi32>
    %c15_i32 = arith.constant 15 : i32
    %17 = vector.broadcast %c15_i32 : i32 to vector<16x128xi32>
    %18 = arith.shrui %16, %17 : vector<16x128xi32>
    %19 = arith.xori %16, %18 : vector<16x128xi32>
    %c-2073274741_i32 = arith.constant -2073274741 : i32
    %20 = vector.broadcast %c-2073274741_i32 : i32 to vector<16x128xi32>
    %21 = arith.muli %19, %20 : vector<16x128xi32>
    %c16_i32_1 = arith.constant 16 : i32
    %22 = vector.broadcast %c16_i32_1 : i32 to vector<16x128xi32>
    %23 = arith.shrui %21, %22 : vector<16x128xi32>
    %24 = arith.xori %21, %23 : vector<16x128xi32>
    %c1_i32 = arith.constant 1 : i32
    %25 = vector.broadcast %c1_i32 : i32 to vector<16x128xi32>
    %26 = arith.shrui %24, %25 : vector<16x128xi32>
    %c1073741824_i32 = arith.constant 1073741824 : i32
    %27 = vector.broadcast %c1073741824_i32 : i32 to vector<16x128xi32>
    %28 = arith.cmpi slt, %26, %27 : vector<16x128xi32>
    %c0_2 = arith.constant 0 : index
    %c0_3 = arith.constant 0 : index
    %29 = vector.load %arg2[%c0_2, %c0_3] : memref<16x128xf32, #tpu.memory_space<vmem>>, vector<16x128xf32>
    %cst = arith.constant 2.000000e+00 : f32
    %30 = vector.broadcast %cst : f32 to vector<16x128xf32>
    %31 = arith.mulf %29, %30 : vector<16x128xf32>
    %cst_4 = arith.constant 0.000000e+00 : f32
    %32 = vector.broadcast %cst_4 : f32 to vector<16x128xf32>
    %33 = arith.select %28, %31, %32 : vector<16x128xi1>, vector<16x128xf32>
    %c0_5 = arith.constant 0 : index
    %c0_6 = arith.constant 0 : index
    %34 = vector.load %arg3[%c0_5, %c0_6] : memref<16x128xf32, #tpu.memory_space<vmem>>, vector<16x128xf32>
    tpu.vector_store %arg3[%c0_5, %c0_6], %33 {strides = array<i32>} : memref<16x128xf32, #tpu.memory_space<vmem>>, vector<16x128xf32>,
    return
  }
  func.func @transform_0(%arg0: i32, %arg1: memref<1xi32, #tpu.memory_space<smem>>) -> (i32, i32) {
    %c0_i32 = arith.constant 0 : i32
    %c0_i32_0 = arith.constant 0 : i32
    return %arg0, %c0_i32 : i32, i32
  }
  func.func @transform_1(%arg0: i32, %arg1: memref<1xi32, #tpu.memory_space<smem>>) -> (i32, i32) {
    %c0_i32 = arith.constant 0 : i32
    %c0_i32_0 = arith.constant 0 : i32
    return %arg0, %c0_i32 : i32, i32
  }
}

</mosaic_0001>

<llo_original>
// kernel: tpu_custom_call.1
$region0: #{tpu_custom_call.1}
  #allocation0 [shape = 'u32[]', space=smem, size = 0x4, offset = 0x4, fixed_abs, tag = 'smem constant byte address 0x4 - core index']
  #allocation1 [shape = 'u32[144,128]{1,0:T(1,128)}', space=vmem, size = 0x12000, scoped, tag = 'internal scratch']
  #allocation2 [shape = 's32[1]{0}', space=sflag, size = 0x4, scoped, tag = 'scoped memory for tpu_custom_call.1']
  #allocation3 [shape = 's32[1]{0:T(128)S(6)}', space=smem, size = 0x200, scoped, tag = 'prefetched SMEM operand 0']
  %s0 = inlined_call_operand.<no memory space> [shape: s32[1], index: 0, kind: input, shape index: {}]
  %s1 = inlined_call_operand.hbm [shape: f32[16,128], index: 1, kind: input, shape index: {}]
  %s2 = inlined_call_operand.hbm [shape: f32[16,128], index: 2, kind: output, shape index: {}]
  %s3 = sld [smem:[#allocation0]]
  $region18: #{tpu_custom_call.1} parent=0
    _
  %s5 = ssub.s32 1, %s3
  %s6 = scalar_select 0, %s5, %s3
  %7 = sst [smem:[#allocation3]] %s0
  $region1: #{tpu_custom_call.1} parent=0
    #allocation4 [shape = 'u8[8192]{0}', space=vmem, size = 0x2000, scoped, tag = 'input window, operand 1, single buffered']
    #allocation5 [shape = 's32[1]{0}', space=sflag, size = 0x4, scoped, tag = 'scoped memory for tpu_custom_call.1']
    #allocation6 [shape = 's32[1]{0}', space=sflag, size = 0x4, scoped, tag = 'scoped memory for tpu_custom_call.1']
    #allocation7 [shape = 'u8[8192]{0}', space=vmem, size = 0x2000, scoped, tag = 'output window, operand 0, single buffered']
    %8 = vsyncpa [#allocation5], 0
    %9 = vsyncpa [#allocation6], 0
    // Predicated region
    $region2: #{tpu_custom_call.1} parent=1 // pred_check
      _
    $region3: #{tpu_custom_call.1} parent=1 // pred_check_branch
      %11 = sbr.rel (0) target = $region5
    $region4: #{tpu_custom_call.1} parent=1 // pred_region
      %s13 = ssub.s32 256, 256
      %14 = vsyncadd [#allocation5], %s13
      %s15 = sshll.u32 [#allocation4], 4
      %s16 = int_to_ptr.vmem [resolvable:$true] %s15
      %21 = dma.hbm_to_vmem [thread:$0]  %s1, 256, %s16, [#allocation5], 128, 128, 8
    $region5: #{tpu_custom_call.1} parent=1 // pred_fallthru
      _
    // Predicated region
    $region6: #{tpu_custom_call.1} parent=1 // pred_check
      _
    $region7: #{tpu_custom_call.1} parent=1 // pred_check_branch
      %23 = sbr.rel (0) target = $region9
    $region8: #{tpu_custom_call.1} parent=1 // pred_region
      %24 = dma.done [#allocation5], 256
    $region9: #{tpu_custom_call.1} parent=1 // pred_fallthru
      _
    %v25 = vlaneseq
    %v26 = vshrl.u32 %v25, 7
    %v27 = vadd.s32 %v26, 8
    %v28 = vlaneseq
    %v29 = vand.u32 %v28, 127
    %s30 = smul.u32 0, 16
    %v31 = vstv %s30
    %v32 = vadd.s32 %v31, %v26
    %v33 = vadd.s32 %v31, %v27
    %v34 = vmul.u32 %v32, 128
    %v35 = vmul.u32 %v33, 128
    %v36 = vadd.s32 %v34, %v29
    %v37 = vadd.s32 %v35, %v29
    %s38 = sld [smem:[#allocation3]]
    %s39 = smul.u32 %s38, 2654435769
    %v40 = vstv %s39
    %v41 = vadd.s32 %v36, %v40
    %v42 = vadd.s32 %v37, %v40
    %v43 = vshrl.u32 %v41, 16
    %v44 = vshrl.u32 %v42, 16
    %v45 = vxor.u32 %v41, %v43
    %v46 = vxor.u32 %v42, %v44
    %v47 = vmul.u32 %v45, 2146121005
    %v48 = vmul.u32 %v46, 2146121005
    %v49 = vshrl.u32 %v47, 15
    %v50 = vshrl.u32 %v48, 15
    %v51 = vxor.u32 %v47, %v49
    %v52 = vxor.u32 %v48, %v50
    %v53 = vmul.u32 %v51, 2221692555
    %v54 = vmul.u32 %v52, 2221692555
    %v55 = vshrl.u32 %v53, 16
    %v56 = vshrl.u32 %v54, 16
    %v57 = vxor.u32 %v53, %v55
    %v58 = vxor.u32 %v54, %v56
    %v59 = vshrl.u32 %v57, 1
    %v60 = vshrl.u32 %v58, 1
    %vm61 = vcmp.lt.s32.totalorder %v59, 1073741824
    %vm62 = vcmp.lt.s32.totalorder %v60, 1073741824
    %v63 = vld [vmem:[#allocation4] sm:$0xff]
    %v64 = vld [vmem:[#allocation4 + $0x8] sm:$0xff]
    %v65 = vmul.f32 %v63, 2.0
    %v66 = vmul.f32 %v64, 2.0
    %v67 = vsel %vm61, %v65, 0.0
    %v68 = vsel %vm62, %v66, 0.0
    %69 = vst [vmem:[#allocation7] sm:$0xff] %v67
    %70 = vst [vmem:[#allocation7 + $0x8] sm:$0xff] %v68
    // Predicated region
    $region10: #{tpu_custom_call.1} parent=1 // pred_check
      _
    $region11: #{tpu_custom_call.1} parent=1 // pred_check_branch
      %72 = sbr.rel (0) target = $region13
    $region12: #{tpu_custom_call.1} parent=1 // pred_region
      %s74 = ssub.s32 256, 256
      %75 = vsyncadd [#allocation6], %s74
      %s76 = sshll.u32 [#allocation7], 4
      %s77 = int_to_ptr.vmem [resolvable:$true] %s76
      %82 = dma.vmem_to_hbm [thread:$0]  %s77, 256, %s2, [#allocation6], 128, 128, 8
    $region13: #{tpu_custom_call.1} parent=1 // pred_fallthru
      _
    // Predicated region
    $region14: #{tpu_custom_call.1} parent=1 // pred_check
      _
    $region15: #{tpu_custom_call.1} parent=1 // pred_check_branch
      %84 = sbr.rel (0) target = $region17
    $region16: #{tpu_custom_call.1} parent=1 // pred_region
      %85 = dma.done [#allocation6], 256
    $region17: #{tpu_custom_call.1} parent=1 // pred_fallthru
      _
    %86 = vsyncpa [#allocation5], 1
    %87 = vsyncpa [#allocation6], 1

</llo_original>
